<compile_context>
chip_gen: v5e
topology: v5e:2x2
jax: 0.10.0
libtpu: 0.0.40
codegen_flags: <defaults>
</compile_context>

<pallas_src>
import jax
import jax.numpy as jnp
from jax import lax
from jax.experimental import pallas as pl
from jax.experimental.pallas import tpu as pltpu

_LANE = 128
_SUB = 8
_TARGET_TILE_ROWS = 2048          # 2048x128 f32 = 1 MiB per stream per buffer
_TARGET_STRIP = 32                # rows per fused reduction strip (stays in vregs)
_MIN_KERNEL_ELEMS = _SUB * _LANE  # below this a fused jnp reduction is already optimal


def _round_up(a, b):
    return -(-a // b) * b


def _num_tensorcores():
    # Best-effort probe: split the reduction across the two TensorCores on v7x-class
    # chips.  v5e/v6e are single-TC, so keep the leading axis trivial there.
    # TODO(synk): verify in an xprof trace that plain "parallel" shards this axis on
    # v7x; if not, switch that axis to pltpu.CORE_PARALLEL.
    try:
        kind = jax.devices()[0].device_kind.lower()
    except Exception:
        return 1
    return 2 if "v7" in kind else 1


def _make_kernel(steps, tile_rows, strip, rows_valid, needs_mask):
    n_strips = tile_rows // strip
    unroll = max(1, min(8, n_strips))

    def tile_sums(x_ref, t_ref, row0, masked):
        def body(i, carry):
            a_pt, a_p, a_t, a_bce = carry
            r0 = pl.multiple_of(i * strip, strip)
            x = x_ref[pl.ds(r0, strip), :].astype(jnp.float32)
            t = t_ref[pl.ds(r0, strip), :].astype(jnp.float32)
            if masked:
                rid = row0 + r0 + lax.broadcasted_iota(jnp.int32, (strip, _LANE), 0)
                valid = rid < rows_valid
                # Neutral fill: sigmoid(-1e4) == 0 and BCE(-1e4, 0) == 0 exactly.
                x = jnp.where(valid, x, -10000.0)
                t = jnp.where(valid, t, 0.0)
            # One transcendental drives both sigmoid and the stable BCE log term.
            e = jnp.exp(-jnp.abs(x))
            r = 1.0 / (1.0 + e)                   # sigmoid(|x|)
            p = jnp.where(x >= 0.0, r, e * r)     # sigmoid(x), no overflow path
            # Stable BCE-with-logits: max(x,0) - x*t + log(1 + exp(-|x|))
            bce = jnp.maximum(x, 0.0) - x * t + jnp.log1p(e)

            def fold(v):  # (strip,128) -> (8,128): pure VPU adds, no XLU
                return v.reshape(-1, _SUB, _LANE).sum(axis=0)

            return (a_pt + fold(p * t), a_p + fold(p),
                    a_t + fold(t), a_bce + fold(bce))

        z = jnp.zeros((_SUB, _LANE), jnp.float32)
        return lax.fori_loop(0, n_strips, body, (z, z, z, z), unroll=unroll)

    def kernel(x_ref, t_ref, acc_ref):
        c = pl.program_id(0)
        s = pl.program_id(1)

        @pl.when(s == 0)
        def _():
            acc_ref[...] = jnp.zeros_like(acc_ref)

        g = c * steps + s            # global tile id (may exceed the real tile count)
        row0 = g * tile_rows

        def accumulate(masked):
            a_pt, a_p, a_t, a_bce = tile_sums(x_ref, t_ref, row0, masked)
            acc_ref[0, 0] += a_pt
            acc_ref[0, 1] += a_p
            acc_ref[0, 2] += a_t
            acc_ref[0, 3] += a_bce

        if needs_mask:
            # Only boundary / duplicated tiles pay for the masking ops at runtime.
            @pl.when(row0 + tile_rows > rows_valid)
            def _():
                accumulate(True)

            @pl.when(row0 + tile_rows <= rows_valid)
            def _():
                accumulate(False)
        else:
            accumulate(False)

    return kernel


def _jnp_ce_dice(x, t, d_weight, smooth):
    x = x.astype(jnp.float32)
    t = t.astype(jnp.float32)
    p = jax.nn.sigmoid(x)
    dice = 1.0 - (2.0 * jnp.sum(p * t) + smooth) / (jnp.sum(p) + jnp.sum(t) + smooth)
    bce = jnp.mean(jnp.maximum(x, 0.0) - x * t + jnp.log1p(jnp.exp(-jnp.abs(x))))
    return (d_weight * dice + (1.0 - d_weight) * bce).astype(jnp.float32)


def ce_dice_loss(prediction, targets, *, d_weight=0.5, smooth=1e-8):
    """CE_DiceLoss forward (reduction='mean').  Returns a scalar float32."""
    assert prediction.shape == targets.shape
    total = int(prediction.size)

    x = jnp.ravel(prediction)
    t = jnp.ravel(targets)
    # Stream in the caller's floating dtype (bf16 halves HBM bytes); upcast in-kernel.
    if not jnp.issubdtype(x.dtype, jnp.floating):
        x = x.astype(jnp.float32)
    if not jnp.issubdtype(t.dtype, jnp.floating):
        t = t.astype(jnp.float32)

    if total < _MIN_KERNEL_ELEMS:
        # Tiny inputs: pallas_call overhead dominates; use a fused jnp reduction.
        return _jnp_ce_dice(x, t, d_weight, smooth)

    rem = total % _LANE
    if rem:
        # Rare ragged case (size not a multiple of 128): pad the last lane-row with
        # self-neutralizing values.  TODO(synk): avoid this full-copy pad by handling
        # the <128-element tail with jnp if it ever matters for real workloads.
        pad = _LANE - rem
        x = jnp.pad(x, (0, pad), constant_values=-10000.0)
        t = jnp.pad(t, (0, pad), constant_values=0.0)

    rows = pl.cdiv(total, _LANE)
    x = x.reshape(rows, _LANE)      # contiguous reshape: no data movement
    t = t.reshape(rows, _LANE)

    tile_rows = min(_TARGET_TILE_ROWS, _round_up(rows, _SUB))
    strip = _TARGET_STRIP
    while tile_rows % strip:        # tile_rows is a multiple of 8, so this terminates
        strip //= 2

    nb = pl.cdiv(rows, tile_rows)           # number of real row tiles
    nsplit = min(_num_tensorcores(), nb)    # leading "parallel" axis (v7x: 2 TCs)
    steps = pl.cdiv(nb, nsplit)
    # True if any grid tile is partially or fully outside the real rows.
    needs_mask = (nsplit * steps * tile_rows) > rows

    kernel = _make_kernel(steps, tile_rows, strip, rows, needs_mask)

    bytes_io = (x.size * x.dtype.itemsize + t.size * t.dtype.itemsize
                + nsplit * 4 * _SUB * _LANE * 4)
    cost = pl.CostEstimate(flops=24 * total, transcendentals=2 * total,
                           bytes_accessed=bytes_io)

    def _in_map(c, s):
        # Clamp so duplicated tiles (c*steps+s >= nb) still point at a valid block;
        # their contribution is zeroed by in-kernel masking.
        return (jnp.minimum(c * steps + s, nb - 1), 0)

    partials = pl.pallas_call(
        kernel,
        out_shape=jax.ShapeDtypeStruct((nsplit, 4, _SUB, _LANE), jnp.float32),
        grid_spec=pltpu.PrefetchScalarGridSpec(
            num_scalar_prefetch=0,
            grid=(nsplit, steps),
            in_specs=[
                pl.BlockSpec((tile_rows, _LANE), _in_map),
                pl.BlockSpec((tile_rows, _LANE), _in_map),
            ],
            out_specs=pl.BlockSpec((1, 4, _SUB, _LANE), lambda c, s: (c, 0, 0, 0)),
        ),
        compiler_params=pltpu.CompilerParams(
            dimension_semantics=("parallel", "arbitrary"),
            vmem_limit_bytes=32 << 20,
        ),
        cost_estimate=cost,
    )(x, t)

    sums = jnp.sum(partials, axis=(0, 2, 3))        # (4,) : pt, p, t, bce
    s_pt, s_p, s_t, s_bce = sums[0], sums[1], sums[2], sums[3]
    dice = 1.0 - (2.0 * s_pt + smooth) / (s_p + s_t + smooth)
    bce_mean = s_bce / jnp.float32(total)
    return (d_weight * dice + (1.0 - d_weight) * bce_mean).astype(jnp.float32)


def _reference(prediction, targets, d_weight=0.5, smooth=1e-8):
    x = prediction.astype(jnp.float32)
    t = targets.astype(jnp.float32)
    p = jax.nn.sigmoid(x)
    inter = 2.0 * jnp.sum(p * t) + smooth
    union = jnp.sum(p) + jnp.sum(t) + smooth
    dice = 1.0 - inter / union
    bce = jnp.mean(jnp.maximum(x, 0.0) - x * t + jnp.log1p(jnp.exp(-jnp.abs(x))))
    return d_weight * dice + (1.0 - d_weight) * bce


if __name__ == "__main__":
    key = jax.random.PRNGKey(0)
    k1, k2 = jax.random.split(key)
    # NCHW logits and binary targets, small shapes.
    pred = jax.random.normal(k1, (2, 4, 16, 16), dtype=jnp.float32)
    targ = (jax.random.uniform(k2, (2, 4, 16, 16)) > 0.5).astype(jnp.float32)

    loss = jax.jit(ce_dice_loss)(pred, targ)
    loss = jax.block_until_ready(loss)

    ref = _reference(pred, targ)
    assert jnp.allclose(loss, ref, atol=1e-5, rtol=1e-5), (loss, ref)
    print("KERNEL_OK")
</pallas_src>

<mosaic_0001>
module attributes {stable_mosaic.version = 11 : i64} {
  func.func @kernel(%arg0: i32, %arg1: i32, %arg2: memref<16x128xf32, #tpu.memory_space<vmem>>, %arg3: memref<16x128xf32, #tpu.memory_space<vmem>>, %arg4: memref<1x4x8x128xf32, #tpu.memory_space<vmem>>) attributes {dimension_semantics = [#tpu.dimension_semantics<parallel>, #tpu.dimension_semantics<arbitrary>], iteration_bounds = array<i64: 1, 1>, scalar_prefetch = 0 : i64, scratch_operands = 0 : i64, tpu.core_type = #tpu.core_type<tc>, window_params = [{transform_indices = @transform_0, window_bounds = array<i64: 16, 128>}, {transform_indices = @transform_1, window_bounds = array<i64: 16, 128>}, {transform_indices = @transform_2, window_bounds = array<i64: 1, 4, 8, 128>}]} {
    %c0_i32 = arith.constant 0 : i32
    %0 = arith.cmpi eq, %arg1, %c0_i32 : i32
    %1 = arith.extui %0 : i1 to i32
    %c0_i32_0 = arith.constant 0 : i32
    %2 = arith.cmpi ne, %1, %c0_i32_0 : i32
    scf.if %2 {
      %cst_41 = arith.constant 0.000000e+00 : f32
      %65 = vector.broadcast %cst_41 : f32 to vector<1x4x8x128xf32>
      %c0_42 = arith.constant 0 : index
      %c0_43 = arith.constant 0 : index
      %c0_44 = arith.constant 0 : index
      %c0_45 = arith.constant 0 : index
      %66 = vector.load %arg4[%c0_42, %c0_43, %c0_44, %c0_45] : memref<1x4x8x128xf32, #tpu.memory_space<vmem>>, vector<1x4x8x128xf32>
      tpu.vector_store %arg4[%c0_42, %c0_43, %c0_44, %c0_45], %65 {strides = array<i32>} : memref<1x4x8x128xf32, #tpu.memory_space<vmem>>, vector<1x4x8x128xf32>,
    } else {
    }
    %cst = arith.constant 0.000000e+00 : f32
    %3 = vector.broadcast %cst : f32 to vector<8x128xf32>
    %c0_i32_1 = arith.constant 0 : i32
    %c16_i32 = arith.constant 16 : i32
    %4 = arith.muli %c0_i32_1, %c16_i32 : i32
    %5 = tpu.assume_multiple %4, 16 : i32
    %6 = arith.index_cast %5 : i32 to index
    %c0 = arith.constant 0 : index
    %7 = vector.load %arg2[%6, %c0] : memref<16x128xf32, #tpu.memory_space<vmem>>, vector<16x128xf32>
    %8 = arith.index_cast %5 : i32 to index
    %c0_2 = arith.constant 0 : index
    %9 = vector.load %arg3[%8, %c0_2] : memref<16x128xf32, #tpu.memory_space<vmem>>, vector<16x128xf32>
    %10 = math.absf %7 : vector<16x128xf32>
    %cst_3 = arith.constant 0.000000e+00 : f32
    %11 = vector.broadcast %cst_3 : f32 to vector<16x128xf32>
    %12 = arith.subf %11, %10 : vector<16x128xf32>
    %13 = math.exp %12 : vector<16x128xf32>
    %cst_4 = arith.constant 1.000000e+00 : f32
    %14 = vector.broadcast %cst_4 : f32 to vector<16x128xf32>
    %15 = arith.addf %14, %13 : vector<16x128xf32>
    %cst_5 = arith.constant 1.000000e+00 : f32
    %16 = vector.broadcast %cst_5 : f32 to vector<16x128xf32>
    %17 = arith.divf %16, %15 : vector<16x128xf32>
    %cst_6 = arith.constant 0.000000e+00 : f32
    %18 = vector.broadcast %cst_6 : f32 to vector<16x128xf32>
    %19 = arith.cmpf oge, %7, %18 : vector<16x128xf32>
    %20 = arith.mulf %13, %17 : vector<16x128xf32>
    %21 = arith.select %19, %17, %20 : vector<16x128xi1>, vector<16x128xf32>
    %cst_7 = arith.constant 0.000000e+00 : f32
    %22 = vector.broadcast %cst_7 : f32 to vector<16x128xf32>
    %23 = arith.maximumf %7, %22 : vector<16x128xf32>
    %24 = arith.mulf %7, %9 : vector<16x128xf32>
    %25 = arith.subf %23, %24 : vector<16x128xf32>
    %26 = math.log1p %13 : vector<16x128xf32>
    %27 = arith.addf %25, %26 : vector<16x128xf32>
    %28 = arith.mulf %21, %9 : vector<16x128xf32>
    %29 = vector.shape_cast %28 : vector<16x128xf32> to vector<2x8x128xf32>
    %cst_8 = arith.constant dense<0.000000e+00> : vector<8x128xf32>
    %30 = vector.multi_reduction <add>, %29, %cst_8 [0] : vector<2x8x128xf32> to vector<8x128xf32>
    %31 = arith.addf %3, %30 : vector<8x128xf32>
    %32 = vector.shape_cast %21 : vector<16x128xf32> to vector<2x8x128xf32>
    %cst_9 = arith.constant dense<0.000000e+00> : vector<8x128xf32>
    %33 = vector.multi_reduction <add>, %32, %cst_9 [0] : vector<2x8x128xf32> to vector<8x128xf32>
    %34 = arith.addf %3, %33 : vector<8x128xf32>
    %35 = vector.shape_cast %9 : vector<16x128xf32> to vector<2x8x128xf32>
    %cst_10 = arith.constant dense<0.000000e+00> : vector<8x128xf32>
    %36 = vector.multi_reduction <add>, %35, %cst_10 [0] : vector<2x8x128xf32> to vector<8x128xf32>
    %37 = arith.addf %3, %36 : vector<8x128xf32>
    %38 = vector.shape_cast %27 : vector<16x128xf32> to vector<2x8x128xf32>
    %cst_11 = arith.constant dense<0.000000e+00> : vector<8x128xf32>
    %39 = vector.multi_reduction <add>, %38, %cst_11 [0] : vector<2x8x128xf32> to vector<8x128xf32>
    %40 = arith.addf %3, %39 : vector<8x128xf32>
    %c1_i32 = arith.constant 1 : i32
    %c0_12 = arith.constant 0 : index
    %c0_13 = arith.constant 0 : index
    %c0_14 = arith.constant 0 : index
    %c0_15 = arith.constant 0 : index
    %41 = vector.load %arg4[%c0_12, %c0_13, %c0_14, %c0_15] : memref<1x4x8x128xf32, #tpu.memory_space<vmem>>, vector<1x1x8x128xf32>
    %42 = vector.shape_cast %41 : vector<1x1x8x128xf32> to vector<8x128xf32>
    %43 = arith.addf %42, %31 : vector<8x128xf32>
    %c0_16 = arith.constant 0 : index
    %c0_17 = arith.constant 0 : index
    %c0_18 = arith.constant 0 : index
    %c0_19 = arith.constant 0 : index
    %44 = vector.load %arg4[%c0_16, %c0_17, %c0_18, %c0_19] : memref<1x4x8x128xf32, #tpu.memory_space<vmem>>, vector<1x1x8x128xf32>
    %45 = vector.shape_cast %44 : vector<1x1x8x128xf32> to vector<8x128xf32>
    %46 = vector.shape_cast %43 : vector<8x128xf32> to vector<1x1x8x128xf32>
    tpu.vector_store %arg4[%c0_16, %c0_17, %c0_18, %c0_19], %46 {strides = array<i32>} : memref<1x4x8x128xf32, #tpu.memory_space<vmem>>, vector<1x1x8x128xf32>,
    %c0_20 = arith.constant 0 : index
    %c1 = arith.constant 1 : index
    %c0_21 = arith.constant 0 : index
    %c0_22 = arith.constant 0 : index
    %47 = vector.load %arg4[%c0_20, %c1, %c0_21, %c0_22] : memref<1x4x8x128xf32, #tpu.memory_space<vmem>>, vector<1x1x8x128xf32>
    %48 = vector.shape_cast %47 : vector<1x1x8x128xf32> to vector<8x128xf32>
    %49 = arith.addf %48, %34 : vector<8x128xf32>
    %c0_23 = arith.constant 0 : index
    %c1_24 = arith.constant 1 : index
    %c0_25 = arith.constant 0 : index
    %c0_26 = arith.constant 0 : index
    %50 = vector.load %arg4[%c0_23, %c1_24, %c0_25, %c0_26] : memref<1x4x8x128xf32, #tpu.memory_space<vmem>>, vector<1x1x8x128xf32>
    %51 = vector.shape_cast %50 : vector<1x1x8x128xf32> to vector<8x128xf32>
    %52 = vector.shape_cast %49 : vector<8x128xf32> to vector<1x1x8x128xf32>
    tpu.vector_store %arg4[%c0_23, %c1_24, %c0_25, %c0_26], %52 {strides = array<i32>} : memref<1x4x8x128xf32, #tpu.memory_space<vmem>>, vector<1x1x8x128xf32>,
    %c0_27 = arith.constant 0 : index
    %c2 = arith.constant 2 : index
    %c0_28 = arith.constant 0 : index
    %c0_29 = arith.constant 0 : index
    %53 = vector.load %arg4[%c0_27, %c2, %c0_28, %c0_29] : memref<1x4x8x128xf32, #tpu.memory_space<vmem>>, vector<1x1x8x128xf32>
    %54 = vector.shape_cast %53 : vector<1x1x8x128xf32> to vector<8x128xf32>
    %55 = arith.addf %54, %37 : vector<8x128xf32>
    %c0_30 = arith.constant 0 : index
    %c2_31 = arith.constant 2 : index
    %c0_32 = arith.constant 0 : index
    %c0_33 = arith.constant 0 : index
    %56 = vector.load %arg4[%c0_30, %c2_31, %c0_32, %c0_33] : memref<1x4x8x128xf32, #tpu.memory_space<vmem>>, vector<1x1x8x128xf32>
    %57 = vector.shape_cast %56 : vector<1x1x8x128xf32> to vector<8x128xf32>
    %58 = vector.shape_cast %55 : vector<8x128xf32> to vector<1x1x8x128xf32>
    tpu.vector_store %arg4[%c0_30, %c2_31, %c0_32, %c0_33], %58 {strides = array<i32>} : memref<1x4x8x128xf32, #tpu.memory_space<vmem>>, vector<1x1x8x128xf32>,
    %c0_34 = arith.constant 0 : index
    %c3 = arith.constant 3 : index
    %c0_35 = arith.constant 0 : index
    %c0_36 = arith.constant 0 : index
    %59 = vector.load %arg4[%c0_34, %c3, %c0_35, %c0_36] : memref<1x4x8x128xf32, #tpu.memory_space<vmem>>, vector<1x1x8x128xf32>
    %60 = vector.shape_cast %59 : vector<1x1x8x128xf32> to vector<8x128xf32>
    %61 = arith.addf %60, %40 : vector<8x128xf32>
    %c0_37 = arith.constant 0 : index
    %c3_38 = arith.constant 3 : index
    %c0_39 = arith.constant 0 : index
    %c0_40 = arith.constant 0 : index
    %62 = vector.load %arg4[%c0_37, %c3_38, %c0_39, %c0_40] : memref<1x4x8x128xf32, #tpu.memory_space<vmem>>, vector<1x1x8x128xf32>
    %63 = vector.shape_cast %62 : vector<1x1x8x128xf32> to vector<8x128xf32>
    %64 = vector.shape_cast %61 : vector<8x128xf32> to vector<1x1x8x128xf32>
    tpu.vector_store %arg4[%c0_37, %c3_38, %c0_39, %c0_40], %64 {strides = array<i32>} : memref<1x4x8x128xf32, #tpu.memory_space<vmem>>, vector<1x1x8x128xf32>,
    return
  }
  func.func @transform_0(%arg0: i32, %arg1: i32) -> (i32, i32) {
    %c1_i32 = arith.constant 1 : i32
    %0 = arith.muli %arg0, %c1_i32 : i32
    %1 = arith.addi %0, %arg1 : i32
    %c0_i32 = arith.constant 0 : i32
    %2 = arith.minsi %1, %c0_i32 : i32
    %c0_i32_0 = arith.constant 0 : i32
    %c0_i32_1 = arith.constant 0 : i32
    return %2, %c0_i32_0 : i32, i32
  }
  func.func @transform_1(%arg0: i32, %arg1: i32) -> (i32, i32) {
    %c1_i32 = arith.constant 1 : i32
    %0 = arith.muli %arg0, %c1_i32 : i32
    %1 = arith.addi %0, %arg1 : i32
    %c0_i32 = arith.constant 0 : i32
    %2 = arith.minsi %1, %c0_i32 : i32
    %c0_i32_0 = arith.constant 0 : i32
    %c0_i32_1 = arith.constant 0 : i32
    return %2, %c0_i32_0 : i32, i32
  }
  func.func @transform_2(%arg0: i32, %arg1: i32) -> (i32, i32, i32, i32) {
    %c0_i32 = arith.constant 0 : i32
    %c0_i32_0 = arith.constant 0 : i32
    %c0_i32_1 = arith.constant 0 : i32
    %c0_i32_2 = arith.constant 0 : i32
    return %arg0, %c0_i32, %c0_i32_0, %c0_i32_1 : i32, i32, i32, i32
  }
}

</mosaic_0001>

<llo_original>
// kernel: ce_dice_loss.1
$region0: #{ce_dice_loss.1}
  #allocation0 [shape = 'u32[]', space=smem, size = 0x4, offset = 0x4, fixed_abs, tag = 'smem constant byte address 0x4 - core index']
  #allocation1 [shape = 'u32[72,128]{1,0:T(1,128)}', space=vmem, size = 0x9000, scoped, tag = 'internal scratch']
  %s0 = inlined_call_operand.vmem [shape: f32[16,128], index: 0, kind: input, shape index: {}]
  %s1 = inlined_call_operand.vmem [shape: f32[16,128], index: 1, kind: input, shape index: {}]
  %s2 = inlined_call_operand.vmem [shape: f32[1,4,8,128], index: 2, kind: output, shape index: {}]
  %s3 = sld [smem:[#allocation0]]
  $region22: #{ce_dice_loss.1} parent=0
    _
  %s5 = ssub.s32 1, %s3
  %s6 = scalar_select 0, %s5, %s3
  // Predicated region
  $region2: #{ce_dice_loss.1} parent=0 // pred_check
    _
  $region3: #{ce_dice_loss.1} parent=0 // pred_check_branch
    %8 = sbr.rel (0) target = $region5
  $region4: #{ce_dice_loss.1} parent=0 // pred_region
    %s9 = sadd.s32 0, 0
    %p10 = scmp.lt.s32.totalorder %s9, 0
    %s11 = scalar_select %p10, %s9, 0
    %s12 = smul.u32 2, %s11
    %p13 = scmp.lt.s32.totalorder %s12, 1
    %s14 = scalar_select %p13, %s12, 1
    %s15 = smul.addr %s14, 8
    %s16 = scalar_lea.vmem %s0, %s15
    %s17 = sadd.s32 0, 0
    %p18 = scmp.lt.s32.totalorder %s17, 0
    %s19 = scalar_select %p18, %s17, 0
    %s20 = smul.u32 2, %s19
  $region5: #{ce_dice_loss.1} parent=0 // pred_fallthru
    _
  // Predicated region
  $region6: #{ce_dice_loss.1} parent=0 // pred_check
    _
  $region7: #{ce_dice_loss.1} parent=0 // pred_check_branch
    %22 = sbr.rel (0) target = $region9
  $region8: #{ce_dice_loss.1} parent=0 // pred_region
    %s23 = sadd.s32 0, 0
    %p24 = scmp.lt.s32.totalorder %s23, 0
    %s25 = scalar_select %p24, %s23, 0
    %s26 = smul.u32 2, %s25
    %p27 = scmp.lt.s32.totalorder %s26, 1
    %s28 = scalar_select %p27, %s26, 1
    %s29 = smul.addr %s28, 8
    %s30 = scalar_lea.vmem %s1, %s29
    %s31 = sadd.s32 0, 0
    %p32 = scmp.lt.s32.totalorder %s31, 0
    %s33 = scalar_select %p32, %s31, 0
    %s34 = smul.u32 2, %s33
  $region9: #{ce_dice_loss.1} parent=0 // pred_fallthru
    _
  %s35 = sadd.s32 0, 0
  %p36 = scmp.lt.s32.totalorder %s35, 0
  %s37 = scalar_select %p36, %s35, 0
  %s38 = smul.u32 2, %s37
  %p39 = scmp.lt.s32.totalorder %s38, 1
  %s40 = scalar_select %p39, %s38, 1
  %s41 = smul.addr %s40, 8
  %s42 = scalar_lea.vmem %s0, %s41
  %s43 = sadd.s32 0, 0
  %p44 = scmp.lt.s32.totalorder %s43, 0
  %s45 = scalar_select %p44, %s43, 0
  %s46 = smul.u32 2, %s45
  %p47 = scmp.lt.s32.totalorder %s46, 1
  %s48 = scalar_select %p47, %s46, 1
  %s49 = smul.addr %s48, 8
  %s50 = scalar_lea.vmem %s1, %s49
  %s51 = sadd.s32 0, 0
  %p52 = scmp.lt.s32.totalorder %s51, 0
  %s53 = scalar_select %p52, %s51, 0
  %s54 = smul.u32 2, %s53
  %p55 = scmp.lt.s32.totalorder %s54, 1
  %s56 = scalar_select %p55, %s54, 1
  %s57 = smul.addr %s56, 8
  %s58 = scalar_lea.vmem %s0, %s57
  %s59 = sadd.s32 0, 0
  %p60 = scmp.lt.s32.totalorder %s59, 0
  %s61 = scalar_select %p60, %s59, 0
  %s62 = smul.u32 2, %s61
  %s63 = sadd.s32 0, 0
  %p64 = scmp.lt.s32.totalorder %s63, 0
  %s65 = scalar_select %p64, %s63, 0
  %s66 = smul.u32 2, %s65
  %p67 = scmp.lt.s32.totalorder %s66, 1
  %s68 = scalar_select %p67, %s66, 1
  %s69 = smul.addr %s68, 8
  %s70 = scalar_lea.vmem %s1, %s69
  %s71 = sadd.s32 0, 0
  %p72 = scmp.lt.s32.totalorder %s71, 0
  %s73 = scalar_select %p72, %s71, 0
  %s74 = smul.u32 2, %s73
  %p75 = scmp.eq.s32.totalorder 0, 0
  // Predicated region
  $region10: #{ce_dice_loss.1} parent=0 // pred_check
    %p76 = pneg %p75
  $region11: #{ce_dice_loss.1} parent=0 // pred_check_branch
    %78 = sbr.rel (%p76) target = $region13
  $region12: #{ce_dice_loss.1} parent=0 // pred_region
    %79 = vst [vmem:[%s2] sm:$0xff] 0.0
    %80 = vst [vmem:[%s2 + $0x8] sm:$0xff] 0.0
    %81 = vst [vmem:[%s2 + $0x10] sm:$0xff] 0.0
    %82 = vst [vmem:[%s2 + $0x18] sm:$0xff] 0.0
  $region13: #{ce_dice_loss.1} parent=0 // pred_fallthru
    _
  %v83 = vld [vmem:[%s58] sm:$0xff]
  %v84 = vld [vmem:[%s58 + $0x8] sm:$0xff]
  %v85 = vld [vmem:[%s70] sm:$0xff]
  %v86 = vld [vmem:[%s70 + $0x8] sm:$0xff]
  %v87 = vand.u32 2147483647, %v83
  %v88 = vand.u32 2147483647, %v84
  %v89 = vsub.f32 0.0, %v87
  %v90 = vsub.f32 0.0, %v88
  %v91 = vmul.f32 %v89, 1.442695
  %v92 = vpow.pop %v91
  %v93 = vmul.f32 %v90, 1.442695
  %v94 = vpow.pop %v93
  %v95 = vadd.f32 %v92, 1.0
  %v96 = vadd.f32 %v94, 1.0
  %v97 = vrcp.pop %v95
  %v98 = vmul.f32 %v95, %v97
  %v99 = vsub.f32 1.0, %v98
  %v100 = vmul.f32 %v97, %v99
  %v101 = vadd.f32 %v97, %v100
  %vm102 = vweird.f32 %v95
  %vm103 = vweird.f32 %v97
  %vm104 = vmor %vm102, %vm103
  %v105 = vsel %vm104, %v97, %v101
  %v106 = vand.u32 2147483647, %v95
  %vm107 = vcmp.eq.f32.partialorder %v106, 8.507059e+37
  %v108 = vand.u32 %v95, 2147483648
  %v109 = vor.u32 1.1754944e-38, %v108
  %v110 = vsel %vm107, %v109, %v105
  %v111 = vmul.f32 1.0, %v110
  %v112 = vrcp.pop %v96
  %v113 = vmul.f32 %v96, %v112
  %v114 = vsub.f32 1.0, %v113
  %v115 = vmul.f32 %v112, %v114
  %v116 = vadd.f32 %v112, %v115
  %vm117 = vweird.f32 %v96
  %vm118 = vweird.f32 %v112
  %vm119 = vmor %vm117, %vm118
  %v120 = vsel %vm119, %v112, %v116
  %v121 = vand.u32 2147483647, %v96
  %vm122 = vcmp.eq.f32.partialorder %v121, 8.507059e+37
  %v123 = vand.u32 %v96, 2147483648
  %v124 = vor.u32 1.1754944e-38, %v123
  %v125 = vsel %vm122, %v124, %v120
  %v126 = vmul.f32 1.0, %v125
  %vm127 = vcmp.ge.f32.partialorder %v83, 0.0
  %vm128 = vcmp.ge.f32.partialorder %v84, 0.0
  %v129 = vmul.f32 %v92, %v111
  %v130 = vmul.f32 %v94, %v126
  %v131 = vsel %vm127, %v111, %v129
  %v132 = vsel %vm128, %v126, %v130
  %v133 = vmax.f32 %v83, 0.0
  %v134 = vmax.f32 %v84, 0.0
  %v135 = vmul.f32 %v83, %v85
  %v136 = vmul.f32 %v84, %v86
  %v137 = vsub.f32 %v133, %v135
  %v138 = vsub.f32 %v134, %v136
  %v139 = vadd.f32 %v92, 1.0
  %v140 = vlog2.pop %v139
  %v141 = vmul.f32 %v140, 0.6931472
  %v142 = vmul.f32 -0.5, %v92
  %v143 = vadd.f32 %v142, 1.0
  %v144 = vmul.f32 %v143, %v92
  %v145 = vand.u32 2147483647, %v92
  %vm146 = vcmp.lt.f32.partialorder %v145, 0.0004427343
  %v147 = vsel %vm146, %v144, %v141
  %v148 = vadd.f32 %v94, 1.0
  %v149 = vlog2.pop %v148
  %v150 = vmul.f32 %v149, 0.6931472
  %v151 = vmul.f32 -0.5, %v94
  %v152 = vadd.f32 %v151, 1.0
  %v153 = vmul.f32 %v152, %v94
  %v154 = vand.u32 2147483647, %v94
  %vm155 = vcmp.lt.f32.partialorder %v154, 0.0004427343
  %v156 = vsel %vm155, %v153, %v150
  %v157 = vadd.f32 %v137, %v147
  %v158 = vadd.f32 %v138, %v156
  %v159 = vmul.f32 %v131, %v85
  %v160 = vmul.f32 %v132, %v86
  %v161 = vadd.f32 %v159, %v160
  %v162 = vadd.f32 %v161, 0.0
  %v163 = vadd.f32 %v131, %v132
  %v164 = vadd.f32 %v163, 0.0
  %v165 = vadd.f32 %v85, %v86
  %v166 = vadd.f32 %v165, 0.0
  %v167 = vadd.f32 %v157, %v158
  %v168 = vadd.f32 %v167, 0.0
  %v169 = vld [vmem:[%s2] sm:$0xff]
  %v170 = vadd.f32 %v169, %v162
  %171 = vst [vmem:[%s2] sm:$0xff] %v170
  %s172 = scalar_lea.vmem %s2, 8
  %v173 = vld [vmem:[%s172] sm:$0xff]
  %v174 = vadd.f32 %v173, %v164
  %175 = vst [vmem:[%s172] sm:$0xff] %v174
  %s176 = scalar_lea.vmem %s2, 16
  %v177 = vld [vmem:[%s176] sm:$0xff]
  %v178 = vadd.f32 %v177, %v166
  %179 = vst [vmem:[%s176] sm:$0xff] %v178
  %s180 = scalar_lea.vmem %s2, 24
  %v181 = vld [vmem:[%s180] sm:$0xff]
  %v182 = vadd.f32 %v181, %v168
  %183 = vst [vmem:[%s180] sm:$0xff] %v182
  // Predicated region
  $region14: #{ce_dice_loss.1} parent=0 // pred_check
    _
  $region15: #{ce_dice_loss.1} parent=0 // pred_check_branch
    %185 = sbr.rel (0) target = $region17
  $region16: #{ce_dice_loss.1} parent=0 // pred_region
    _
  $region17: #{ce_dice_loss.1} parent=0 // pred_fallthru
    _
  // Predicated region
  $region18: #{ce_dice_loss.1} parent=0 // pred_check
    _
  $region19: #{ce_dice_loss.1} parent=0 // pred_check_branch
    %187 = sbr.rel (0) target = $region21
  $region20: #{ce_dice_loss.1} parent=0 // pred_region
    _
  $region21: #{ce_dice_loss.1} parent=0 // pred_fallthru
    _

</llo_original>
